<compile_context>
chip_gen: v5e
topology: v5e:2x2
jax: 0.10.0
libtpu: 0.0.40
codegen_flags: <defaults>
</compile_context>

<pallas_src>
import functools

import jax
import jax.numpy as jnp
from jax.experimental import pallas as pl
from jax.experimental.pallas import tpu as pltpu


def _conv1x1_lrelu_kernel(x_ref, w_ref, b_ref, o_ref, *, c_in, use_mxu,
                          negative_slope):
    """Pointwise channel mix + bias + LeakyReLU on one lane-dense tile.

    x_ref: (C_in, TL)    activation tile
    w_ref: (C_out, C_in) resident weight
    b_ref: (C_out, 1)    resident bias (f32)
    o_ref: (C_out, TL)   output tile
    """
    x = x_ref[...]
    w = w_ref[...]
    if use_mxu:
        y = jnp.dot(w, x, preferred_element_type=jnp.float32)
    else:
        # Unrolled VPU broadcast-FMA over the (tiny) channel reduction.
        xf = x.astype(jnp.float32)
        wf = w.astype(jnp.float32)
        y = wf[:, 0:1] * xf[0:1, :]
        for k in range(1, c_in):
            y = y + wf[:, k:k + 1] * xf[k:k + 1, :]
    y = y + b_ref[...].astype(jnp.float32)        # bias broadcast over lanes
    y = jnp.maximum(y, negative_slope * y)        # LeakyReLU(0.1), slope < 1
    o_ref[...] = y.astype(o_ref.dtype)


def _round_up(v, m):
    return ((v + m - 1) // m) * m


def _choose_lane_tile(lane_extent, c_in, c_out, lane_tile_cap, itemsize):
    """Pick a lane tile (multiple of 128) and a VMEM limit.

    Counts the sublane padding: a (C, TL) f32 block with C < 8 still occupies
    8 sublanes per (8,128) VMEM tile, i.e. 2x its logical bytes for C_in=4.
    """
    rows_in = _round_up(max(c_in, 1), 8)
    rows_out = _round_up(max(c_out, 1), 8)
    bytes_per_lane_db = 2 * (rows_in + rows_out) * itemsize   # double-buffered in+out
    vmem_tile_budget = 40 * 1024 * 1024                       # headroom under v7x's 64 MiB
    tl_by_vmem = max(128, (vmem_tile_budget // bytes_per_lane_db) // 128 * 128)
    tl = min(lane_tile_cap, tl_by_vmem, _round_up(lane_extent, 128))
    tl = max(128, (tl // 128) * 128)
    # Make sure v7x's two TensorCores both get a grid step when possible.
    if pl.cdiv(lane_extent, tl) == 1 and _round_up(lane_extent, 128) >= 256:
        tl = max(128, _round_up(pl.cdiv(lane_extent, 2), 128))
    vmem_limit = int(min(48 * 1024 * 1024,
                         max(32 * 1024 * 1024, bytes_per_lane_db * tl + (2 << 20))))
    return tl, vmem_limit


def conv1d_norm_relu(x, weight, bias, *, lane_tile=131072, negative_slope=0.1,
                     bf16_io=False, force_pallas=False,
                     small_problem_threshold=16384):
    """Fused Conv1d(kernel_size=1, groups=1) + Identity norm + LeakyReLU.

    x: (N, C_in, L) ; weight: (C_out, C_in, 1) ; bias: (C_out,) -> (N, C_out, L)
    """
    n, c_in, length = x.shape
    c_out = weight.shape[0]
    assert weight.shape == (c_out, c_in, 1), "only kernel_size=1 / groups=1 supported"
    # TODO(synk): kernel_size>1, stride/padding/dilation, groups>1 and the
    # batch_norm / instance_norm variants of the module are not implemented here
    # (the module is instantiated with its defaults: 1x1 conv, norm=None).

    w2d = weight.reshape(c_out, c_in)
    b2d = bias.reshape(c_out, 1).astype(jnp.float32)

    # Tiny problems: wrapper copies + kernel launch dominate; plain fused XLA wins.
    if (not force_pallas) and n * length <= small_problem_threshold:
        y = jnp.einsum("oc,ncl->nol", w2d, x) + bias[None, :, None]
        return jnp.where(y > 0, y, negative_slope * y)

    # Opt-in bf16 I/O (halves HBM bytes on this bandwidth-bound op); f32 accumulation.
    io_dtype = jnp.bfloat16 if bf16_io else x.dtype
    xc = x.astype(io_dtype)
    wc = w2d.astype(io_dtype)
    itemsize = jnp.dtype(io_dtype).itemsize

    use_mxu = c_in >= 8   # tiny reductions: VPU FMAs; larger: use the otherwise-idle MXU
    kernel = functools.partial(_conv1x1_lrelu_kernel, c_in=c_in, use_mxu=use_mxu,
                               negative_slope=negative_slope)

    cost = pl.CostEstimate(
        flops=2 * c_out * c_in * n * length,
        transcendentals=0,
        bytes_accessed=itemsize * (c_in + c_out) * n * length
                       + 4 * (c_out * c_in + c_out),
    )

    direct = length >= 256   # lane axis stays dense without folding the batch

    if direct:
        # No host-side layout shuffles: index (N, C, L) directly.
        tl, vmem_limit = _choose_lane_tile(length, c_in, c_out, lane_tile, itemsize)
        l_tiles = pl.cdiv(length, tl)
        return pl.pallas_call(
            kernel,
            out_shape=jax.ShapeDtypeStruct((n, c_out, length), io_dtype),
            grid_spec=pltpu.PrefetchScalarGridSpec(
                num_scalar_prefetch=0,
                grid=(n, l_tiles),
                in_specs=[
                    pl.BlockSpec((None, c_in, tl), lambda b, j: (b, 0, j)),
                    pl.BlockSpec((c_out, c_in), lambda b, j: (0, 0)),   # resident
                    pl.BlockSpec((c_out, 1), lambda b, j: (0, 0)),      # resident
                ],
                out_specs=pl.BlockSpec((None, c_out, tl), lambda b, j: (b, 0, j)),
            ),
            compiler_params=pltpu.CompilerParams(
                dimension_semantics=("parallel", "parallel"),
                vmem_limit_bytes=vmem_limit,
            ),
            cost_estimate=cost,
        )(xc, wc, b2d)

    # Small L: fold batch into the lane axis (C_in, N*L); pad lanes only to a
    # multiple of 128 and let Pallas mask any partial final tile.
    p = n * length
    x2d = jnp.transpose(xc, (1, 0, 2)).reshape(c_in, p)
    p128 = _round_up(p, 128)
    if p128 != p:
        x2d = jnp.pad(x2d, ((0, 0), (0, p128 - p)))
    tl, vmem_limit = _choose_lane_tile(p128, c_in, c_out, lane_tile, itemsize)
    n_tiles = pl.cdiv(p128, tl)

    out2d = pl.pallas_call(
        kernel,
        out_shape=jax.ShapeDtypeStruct((c_out, p128), io_dtype),
        grid_spec=pltpu.PrefetchScalarGridSpec(
            num_scalar_prefetch=0,
            grid=(n_tiles,),
            in_specs=[
                pl.BlockSpec((c_in, tl), lambda i: (0, i)),     # activation tile
                pl.BlockSpec((c_out, c_in), lambda i: (0, 0)),  # resident weight
                pl.BlockSpec((c_out, 1), lambda i: (0, 0)),     # resident bias
            ],
            out_specs=pl.BlockSpec((c_out, tl), lambda i: (0, i)),
        ),
        compiler_params=pltpu.CompilerParams(
            dimension_semantics=("parallel",),
            vmem_limit_bytes=vmem_limit,
        ),
        cost_estimate=cost,
    )(x2d, wc, b2d)

    out2d = out2d[:, :p]
    return jnp.transpose(out2d.reshape(c_out, n, length), (1, 0, 2))


if __name__ == "__main__":
    # Module config mirrored: Conv1dNormRelu(in_channels=4, out_channels=8)
    # -> kernel_size=1, stride=1, padding=0, groups=1, norm=None (Identity),
    #    activation='leaky_relu' (slope 0.1).
    N, C_IN, C_OUT, L = 2, 4, 8, 16

    key = jax.random.PRNGKey(0)
    kx, kw, kb, kx2 = jax.random.split(key, 4)

    x = jax.random.normal(kx, (N, C_IN, L), dtype=jnp.float32)
    fan_in = C_IN * 1
    bound = 1.0 / (fan_in ** 0.5)
    weight = jax.random.uniform(kw, (C_OUT, C_IN, 1), dtype=jnp.float32,
                                minval=-bound, maxval=bound)
    bias = jax.random.uniform(kb, (C_OUT,), dtype=jnp.float32,
                              minval=-bound, maxval=bound)

    def ref_fn(xv):
        y = jnp.einsum("oc,ncl->nol", weight[..., 0], xv) + bias[None, :, None]
        return jnp.where(y > 0, y, 0.1 * y)

    # 1) Folded-lane Pallas path (small L); force the kernel past the XLA fallback.
    out = jax.block_until_ready(conv1d_norm_relu(x, weight, bias, force_pallas=True))
    assert out.shape == (N, C_OUT, L)
    assert jnp.allclose(out, ref_fn(x), atol=1e-5, rtol=1e-5)

    # 2) Direct (N, L-tiles) Pallas path: no wrapper transposes, 2-D parallel grid.
    L2 = 384
    x2 = jax.random.normal(kx2, (N, C_IN, L2), dtype=jnp.float32)
    out2 = jax.block_until_ready(conv1d_norm_relu(x2, weight, bias, force_pallas=True))
    assert out2.shape == (N, C_OUT, L2)
    assert jnp.allclose(out2, ref_fn(x2), atol=1e-5, rtol=1e-5)

    print("KERNEL_OK")
</pallas_src>

<mosaic_0001>
module attributes {stable_mosaic.version = 11 : i64} {
  func.func @_conv1x1_lrelu_kernel(%arg0: i32, %arg1: memref<4x128xf32, #tpu.memory_space<vmem>>, %arg2: memref<8x4xf32, #tpu.memory_space<vmem>>, %arg3: memref<8x1xf32, #tpu.memory_space<vmem>>, %arg4: memref<8x128xf32, #tpu.memory_space<vmem>>) attributes {dimension_semantics = [#tpu.dimension_semantics<parallel>], iteration_bounds = array<i64: 1>, scalar_prefetch = 0 : i64, scratch_operands = 0 : i64, tpu.core_type = #tpu.core_type<tc>, window_params = [{transform_indices = @transform_0, window_bounds = array<i64: 4, 128>}, {pipeline_mode = #tpu.pipeline_mode<synchronous>, transform_indices = @transform_1, window_bounds = array<i64: 8, 4>}, {pipeline_mode = #tpu.pipeline_mode<synchronous>, transform_indices = @transform_2, window_bounds = array<i64: 8, 1>}, {transform_indices = @transform_3, window_bounds = array<i64: 8, 128>}]} {
    %c0 = arith.constant 0 : index
    %c0_0 = arith.constant 0 : index
    %0 = vector.load %arg1[%c0, %c0_0] : memref<4x128xf32, #tpu.memory_space<vmem>>, vector<4x128xf32>
    %c0_1 = arith.constant 0 : index
    %c0_2 = arith.constant 0 : index
    %1 = vector.load %arg2[%c0_1, %c0_2] : memref<8x4xf32, #tpu.memory_space<vmem>>, vector<8x4xf32>
    %2 = vector.extract_strided_slice %1 {offsets = [0, 0], sizes = [8, 1], strides = [1, 1]} : vector<8x4xf32> to vector<8x1xf32>
    %3 = vector.extract_strided_slice %0 {offsets = [0, 0], sizes = [1, 128], strides = [1, 1]} : vector<4x128xf32> to vector<1x128xf32>
    %4 = vector.broadcast %2 : vector<8x1xf32> to vector<8x128xf32>
    %5 = vector.broadcast %3 : vector<1x128xf32> to vector<8x128xf32>
    %6 = arith.mulf %4, %5 : vector<8x128xf32>
    %7 = vector.extract_strided_slice %1 {offsets = [0, 1], sizes = [8, 1], strides = [1, 1]} : vector<8x4xf32> to vector<8x1xf32>
    %8 = vector.extract_strided_slice %0 {offsets = [1, 0], sizes = [1, 128], strides = [1, 1]} : vector<4x128xf32> to vector<1x128xf32>
    %9 = vector.broadcast %7 : vector<8x1xf32> to vector<8x128xf32>
    %10 = vector.broadcast %8 : vector<1x128xf32> to vector<8x128xf32>
    %11 = arith.mulf %9, %10 : vector<8x128xf32>
    %12 = arith.addf %6, %11 : vector<8x128xf32>
    %13 = vector.extract_strided_slice %1 {offsets = [0, 2], sizes = [8, 1], strides = [1, 1]} : vector<8x4xf32> to vector<8x1xf32>
    %14 = vector.extract_strided_slice %0 {offsets = [2, 0], sizes = [1, 128], strides = [1, 1]} : vector<4x128xf32> to vector<1x128xf32>
    %15 = vector.broadcast %13 : vector<8x1xf32> to vector<8x128xf32>
    %16 = vector.broadcast %14 : vector<1x128xf32> to vector<8x128xf32>
    %17 = arith.mulf %15, %16 : vector<8x128xf32>
    %18 = arith.addf %12, %17 : vector<8x128xf32>
    %19 = vector.extract_strided_slice %1 {offsets = [0, 3], sizes = [8, 1], strides = [1, 1]} : vector<8x4xf32> to vector<8x1xf32>
    %20 = vector.extract_strided_slice %0 {offsets = [3, 0], sizes = [1, 128], strides = [1, 1]} : vector<4x128xf32> to vector<1x128xf32>
    %21 = vector.broadcast %19 : vector<8x1xf32> to vector<8x128xf32>
    %22 = vector.broadcast %20 : vector<1x128xf32> to vector<8x128xf32>
    %23 = arith.mulf %21, %22 : vector<8x128xf32>
    %24 = arith.addf %18, %23 : vector<8x128xf32>
    %c0_3 = arith.constant 0 : index
    %c0_4 = arith.constant 0 : index
    %25 = vector.load %arg3[%c0_3, %c0_4] : memref<8x1xf32, #tpu.memory_space<vmem>>, vector<8x1xf32>
    %26 = vector.broadcast %25 : vector<8x1xf32> to vector<8x128xf32>
    %27 = arith.addf %24, %26 : vector<8x128xf32>
    %cst = arith.constant 1.000000e-01 : f32
    %28 = vector.broadcast %cst : f32 to vector<8x128xf32>
    %29 = arith.mulf %28, %27 : vector<8x128xf32>
    %30 = arith.maximumf %27, %29 : vector<8x128xf32>
    %c0_5 = arith.constant 0 : index
    %c0_6 = arith.constant 0 : index
    %31 = vector.load %arg4[%c0_5, %c0_6] : memref<8x128xf32, #tpu.memory_space<vmem>>, vector<8x128xf32>
    tpu.vector_store %arg4[%c0_5, %c0_6], %30 {strides = array<i32>} : memref<8x128xf32, #tpu.memory_space<vmem>>, vector<8x128xf32>,
    return
  }
  func.func @transform_0(%arg0: i32) -> (i32, i32) {
    %c0_i32 = arith.constant 0 : i32
    %c0_i32_0 = arith.constant 0 : i32
    return %c0_i32, %arg0 : i32, i32
  }
  func.func @transform_1(%arg0: i32) -> (i32, i32) {
    %c0_i32 = arith.constant 0 : i32
    %c0_i32_0 = arith.constant 0 : i32
    %c0_i32_1 = arith.constant 0 : i32
    return %c0_i32, %c0_i32_0 : i32, i32
  }
  func.func @transform_2(%arg0: i32) -> (i32, i32) {
    %c0_i32 = arith.constant 0 : i32
    %c0_i32_0 = arith.constant 0 : i32
    %c0_i32_1 = arith.constant 0 : i32
    return %c0_i32, %c0_i32_0 : i32, i32
  }
  func.func @transform_3(%arg0: i32) -> (i32, i32) {
    %c0_i32 = arith.constant 0 : i32
    %c0_i32_0 = arith.constant 0 : i32
    return %c0_i32, %arg0 : i32, i32
  }
}

</mosaic_0001>

<llo_original>
// kernel: tpu_custom_call.1
$region0: #{tpu_custom_call.1}
  #allocation0 [shape = 'u32[]', space=smem, size = 0x4, offset = 0x4, fixed_abs, tag = 'smem constant byte address 0x4 - core index']
  #allocation1 [shape = 'u32[72,128]{1,0:T(1,128)}', space=vmem, size = 0x9000, scoped, tag = 'internal scratch']
  %s0 = inlined_call_operand.vmem [shape: f32[4,128], index: 0, kind: input, shape index: {}]
  %s1 = inlined_call_operand.vmem [shape: f32[8,4], index: 1, kind: input, shape index: {}]
  %s2 = inlined_call_operand.vmem [shape: f32[8,1], index: 2, kind: input, shape index: {}]
  %s3 = inlined_call_operand.hbm [shape: f32[8,128], index: 3, kind: output, shape index: {}]
  %s4 = sld [smem:[#allocation0]]
  $region22: #{tpu_custom_call.1} parent=0
    _
  %s6 = ssub.s32 1, %s4
  %s7 = scalar_select 0, %s6, %s4
  $region1: #{tpu_custom_call.1} parent=0
    #allocation2 [shape = 'u8[4096]{0}', space=vmem, size = 0x1000, scoped, tag = 'output window, operand 0, single buffered']
    #allocation3 [shape = 's32[1]{0}', space=sflag, size = 0x4, scoped, tag = 'scoped memory for tpu_custom_call.1']
    %8 = vsyncpa [#allocation3], 0
    // Predicated region
    $region2: #{tpu_custom_call.1} parent=1 // pred_check
      _
    $region3: #{tpu_custom_call.1} parent=1 // pred_check_branch
      %10 = sbr.rel (0) target = $region5
    $region4: #{tpu_custom_call.1} parent=1 // pred_region
      _
    $region5: #{tpu_custom_call.1} parent=1 // pred_fallthru
      _
    // Predicated region
    $region6: #{tpu_custom_call.1} parent=1 // pred_check
      _
    $region7: #{tpu_custom_call.1} parent=1 // pred_check_branch
      %12 = sbr.rel (0) target = $region9
    $region8: #{tpu_custom_call.1} parent=1 // pred_region
      _
    $region9: #{tpu_custom_call.1} parent=1 // pred_fallthru
      _
    // Predicated region
    $region10: #{tpu_custom_call.1} parent=1 // pred_check
      _
    $region11: #{tpu_custom_call.1} parent=1 // pred_check_branch
      %14 = sbr.rel (0) target = $region13
    $region12: #{tpu_custom_call.1} parent=1 // pred_region
      _
    $region13: #{tpu_custom_call.1} parent=1 // pred_fallthru
      _
    %v15 = vld [vmem:[%s0] sm:$0xf]
    %v16 = vld [vmem:[%s1] sm:$0xff]
    %18 = vset.pattern.permute.xlu0 0
    %19 = vperm.xlu0 %18, %v16
    %v20 = vpop.permute.xlu0 %19
    %v22 = vperm.slane %v15, 0
    %v23 = vmul.f32 %v20, %v22
    %24 = vset.pattern.permute.xlu0 1
    %25 = vperm.xlu0 %24, %v16
    %v26 = vpop.permute.xlu0 %25
    %v28 = vperm.slane %v15, 1
    %v29 = vmul.f32 %v26, %v28
    %v30 = vadd.f32 %v23, %v29
    %31 = vset.pattern.permute.xlu0 2
    %32 = vperm.xlu0 %31, %v16
    %v33 = vpop.permute.xlu0 %32
    %v35 = vperm.slane %v15, 2
    %v36 = vmul.f32 %v33, %v35
    %v37 = vadd.f32 %v30, %v36
    %38 = vset.pattern.permute.xlu0 3
    %39 = vperm.xlu0 %38, %v16
    %v40 = vpop.permute.xlu0 %39
    %v42 = vperm.slane %v15, 3
    %v43 = vmul.f32 %v40, %v42
    %v44 = vadd.f32 %v37, %v43
    %v45 = vld [vmem:[%s2] sm:$0xff]
    %47 = vset.pattern.permute.xlu0 0
    %48 = vperm.xlu0 %47, %v45
    %v49 = vpop.permute.xlu0 %48
    %v51 = vadd.f32 %v44, %v49
    %v52 = vmul.f32 %v51, 0.1
    %v53 = vmax.f32 %v51, %v52
    %54 = vst [vmem:[#allocation2] sm:$0xff] %v53
    // Predicated region
    $region14: #{tpu_custom_call.1} parent=1 // pred_check
      _
    $region15: #{tpu_custom_call.1} parent=1 // pred_check_branch
      %56 = sbr.rel (0) target = $region17
    $region16: #{tpu_custom_call.1} parent=1 // pred_region
      %58 = vsyncadd [#allocation3], 0
      %s60 = sshll.u32 [#allocation2], 4
      %s61 = int_to_ptr.vmem [resolvable:$true] %s60
      %s62 = sshll.u32 %s3, 4
      %s63 = int_to_ptr.hbm [resolvable:$true] %s62
      %65 = dma.vmem_to_hbm [thread:$0]  %s61, 128, %s63, [#allocation3]
    $region17: #{tpu_custom_call.1} parent=1 // pred_fallthru
      _
    // Predicated region
    $region18: #{tpu_custom_call.1} parent=1 // pred_check
      _
    $region19: #{tpu_custom_call.1} parent=1 // pred_check_branch
      %67 = sbr.rel (0) target = $region21
    $region20: #{tpu_custom_call.1} parent=1 // pred_region
      %69 = dma.done [#allocation3], 128
    $region21: #{tpu_custom_call.1} parent=1 // pred_fallthru
      _
    %70 = vsyncpa [#allocation3], 1

</llo_original>
